<compile_context>
chip_gen: v7x
topology: tpu7x:2x2x1
jax: 0.10.0
libtpu: 0.0.40
codegen_flags: <defaults>
</compile_context>

<pallas_src>
import math
import numpy as np

import jax
import jax.numpy as jnp
from jax import lax
from jax.experimental import pallas as pl
from jax.experimental.pallas import tpu as pltpu

EPS = 1e-05


def _round_up(x, m):
    return ((x + m - 1) // m) * m


def _ceil_div(a, b):
    return -(-a // b)


# --------------------------------------------------------------------------
# Generation-aware hardware configuration (best effort, safe fallbacks)
# --------------------------------------------------------------------------
def _hw_config():
    kind = ""
    try:
        kind = jax.devices()[0].device_kind.lower()
    except Exception:
        pass
    if "v7" in kind or "7x" in kind:          # v7x: 64 MiB VMEM / TC, 2 TCs/chip
        cfg = dict(vmem=64 << 20, cores=2, mxu_m=256)
    elif "v6" in kind:                        # v6e: 128 MiB VMEM, 1 TC
        cfg = dict(vmem=128 << 20, cores=1, mxu_m=256)
    elif "v5p" in kind or "v4" in kind:       # megacore chips: 2 TCs
        cfg = dict(vmem=128 << 20, cores=2, mxu_m=128)
    elif "v5" in kind:                        # v5e: 128 MiB VMEM, 1 TC
        cfg = dict(vmem=128 << 20, cores=1, mxu_m=128)
    else:                                     # unknown: conservative (v7x-like)
        cfg = dict(vmem=64 << 20, cores=1, mxu_m=256)
    try:
        # Refine downwards only (never raise above the per-generation table,
        # which already matches physical per-TensorCore VMEM).
        info = pltpu.get_tpu_info()
        vmem = int(getattr(info, "vmem_capacity_bytes", 0) or 0)
        if vmem > 0:
            cfg["vmem"] = min(cfg["vmem"], vmem)
    except Exception:
        pass
    # Scoped-VMEM request: lifts v5e/v6e's small scoped default towards their
    # 128 MiB physical VMEM, stays well inside v7x's 64 MiB.
    cfg["vmem_limit"] = int(min(96 << 20, max(32 << 20, cfg["vmem"] - (24 << 20))))
    # Budget used for tile sizing (double-buffered I/O + in-kernel scratch).
    cfg["budget"] = int(cfg["vmem_limit"] * 3 // 5)
    return cfg


def _choose_group_tile(G, Nb, N_pad, D, budget_bytes, mxu_m, num_cores):
    """Groups of Nb proposals per grid step for kernel 1.

    VMEM accounting per group:
      double-buffered I/O : bf16 vis tile + f32/i32 (1, N_pad) output rows
      single-buffered     : f32 similarity (plus one reshape copy) and the
                            small running max / argmax / predicate temps
    The resident word block is double-buffered overhead (`fixed`).
    """
    io_pg = 2 * (Nb * D * 2) + 2 * (2 * N_pad * 4)
    comp_pg = 2 * (Nb * N_pad * 4) + 4 * (N_pad * 4)
    fixed = 2 * (N_pad * D * 2)
    cap = max(1, (budget_bytes - fixed) // (io_pg + comp_pg))
    cap = min(cap, G)
    if num_cores > 1 and G >= num_cores:
        # Multi-TC chips: keep >= num_cores grid steps so both cores get work.
        cap = min(cap, _ceil_div(G, num_cores))
    T = _ceil_div(G, cap)          # fewest steps the caps allow
    tile = _ceil_div(G, T)         # balanced work per step
    g_mxu = max(1, mxu_m // max(Nb, 1))
    tile_aligned = _round_up(tile, g_mxu)
    if tile_aligned <= cap:        # prefer an MXU-shaped M = tile*Nb when it fits
        tile = tile_aligned
    return int(max(tile, 1))


# --------------------------------------------------------------------------
# Pallas kernel 1: masked similarity, fused max / argmax over Nb proposals
# --------------------------------------------------------------------------
def _sim_kernel(v_ref, w_ref, smax_ref, sind_ref):
    # v_ref   : (G_TILE, Nb, D)  bf16 proposals of G_TILE (action, segment) groups
    # w_ref   : (N_pad, D)       bf16 word features; masked columns already zeroed
    # smax_ref: (G_TILE, N_pad)  f32  max over the Nb proposal axis
    # sind_ref: (G_TILE, N_pad)  i32  (first occurrence) argmax over Nb
    gt, nb, d = v_ref.shape
    npad = w_ref.shape[0]
    # Layout-free when Nb is a multiple of 8 (sublane); otherwise Mosaic
    # inserts a relayout copy but stays correct.
    v = v_ref[...].reshape(gt * nb, d)
    s = lax.dot_general(
        v, w_ref[...],
        dimension_numbers=(((1,), (1,)), ((), ())),
        preferred_element_type=jnp.float32,
    )                                              # (gt*nb, N_pad) f32 accum
    s3 = s.reshape(gt, nb, npad)

    # Unrolled running max / argmax over the Nb axis: no (gt, nb, npad) i32
    # intermediates, only (gt, npad)-sized temporaries stay live.
    mx = s3[:, 0, :]
    idx = jnp.zeros((gt, npad), jnp.int32)
    for i in range(1, nb):
        si = s3[:, i, :]
        upd = si > mx                              # strict > keeps first occurrence
        mx = jnp.where(upd, si, mx)
        idx = jnp.where(upd, jnp.int32(i), idx)
    smax_ref[...] = mx
    sind_ref[...] = idx


def masked_similarity(vis_feats, word_feats, col_keep, Na, Ns, Nb, hw):
    """Returns (S_max, D_ind), each (Na*Ns, Na*Ne): max / argmax over the Nb
    proposal axis of the column-masked similarity vis @ word.T.  The full
    (M, N) similarity matrix is never written to HBM."""
    M, D = vis_feats.shape
    N = word_feats.shape[0]
    G = Na * Ns
    N_pad = _round_up(N, 128)

    v3 = vis_feats.reshape(G, Nb, D).astype(jnp.bfloat16)
    # Column keep mask folded into the word features: zeroed word rows give
    # exactly zero similarity, identical to masked_fill_(S_mask, 0).
    # NOTE: bf16 MXU inputs (f32 accumulation); values / tie-breaks can differ
    # from an f32 torch reference at bf16 tolerance.
    w_masked = (word_feats * col_keep[:, None]).astype(jnp.bfloat16)
    if N_pad != N:
        w_pad = jnp.zeros((N_pad, D), jnp.bfloat16).at[:N, :].set(w_masked)
    else:
        w_pad = w_masked

    G_TILE = _choose_group_tile(G, Nb, N_pad, D, hw["budget"], hw["mxu_m"],
                                hw["cores"])
    T = _ceil_div(G, G_TILE)
    G_pad = T * G_TILE
    if G_pad != G:   # padded tail groups (zeros) are sliced away below
        v3 = jnp.zeros((G_pad, Nb, D), jnp.bfloat16).at[:G].set(v3)

    out_shape = (
        jax.ShapeDtypeStruct((T, G_TILE, N_pad), jnp.float32),
        jax.ShapeDtypeStruct((T, G_TILE, N_pad), jnp.int32),
    )
    grid_spec = pltpu.PrefetchScalarGridSpec(
        num_scalar_prefetch=0,
        grid=(T,),
        in_specs=[
            pl.BlockSpec((G_TILE, Nb, D), lambda t: (t, 0, 0)),
            pl.BlockSpec((N_pad, D), lambda t: (0, 0)),
        ],
        out_specs=(
            pl.BlockSpec((None, G_TILE, N_pad), lambda t: (t, 0, 0)),
            pl.BlockSpec((None, G_TILE, N_pad), lambda t: (t, 0, 0)),
        ),
    )
    smax, sind = pl.pallas_call(
        _sim_kernel,
        out_shape=out_shape,
        grid_spec=grid_spec,
        compiler_params=pltpu.CompilerParams(
            dimension_semantics=("parallel",),
            vmem_limit_bytes=hw["vmem_limit"]),
    )(v3, w_pad)

    smax = smax.reshape(G_pad, N_pad)[:G, :N]
    sind = sind.reshape(G_pad, N_pad)[:G, :N]
    return smax, sind


# --------------------------------------------------------------------------
# Pallas kernel 2: visual-consistency loss statistics
#   one (R, D) @ (D, R) MXU Gram per step, block-diagonal + keep mask,
#   reduced in-kernel to a lane-dense (1, 128) [sum, count] slab.
# --------------------------------------------------------------------------
def _gram_kernel(x_ref, keep_ref, m_ref, o_ref):
    # x_ref   : (R, D)   bf16   R = B_TILE*Ns, rows of one group consecutive
    # keep_ref: (R, 1)   f32    1.0 if this row's (action, entity) group is kept
    # m_ref   : (R, R)   f32    structural mask: same-group AND off-diagonal
    # o_ref   : (1, 128) f32    lane 0 = sum of masked (1 - G), lane 1 = nnz count
    x = x_ref[...]
    g = lax.dot_general(
        x, x,
        dimension_numbers=(((1,), (1,)), ((), ())),
        preferred_element_type=jnp.float32,
    )                                              # (R, R) f32
    keep = (m_ref[...] > 0.0) & (keep_ref[...] > 0.0)
    val = jnp.where(keep, 1.0 - g, 0.0)
    nnz = jnp.where(keep & (g != 1.0), 1.0, 0.0)   # nonzero() semantics of the ref
    ssum = jnp.sum(jnp.sum(val, axis=1, keepdims=True), axis=0, keepdims=True)
    scnt = jnp.sum(jnp.sum(nnz, axis=1, keepdims=True), axis=0, keepdims=True)
    lane = lax.broadcasted_iota(jnp.int32, (1, 128), 1)
    o_ref[...] = (jnp.where(lane == 0, ssum, 0.0)
                  + jnp.where(lane == 1, scnt, 0.0))


def masked_gram_stats(x_flat, row_keep, Ns, hw):
    """x_flat: (B*Ns, D) bf16 with the Ns rows of each group consecutive.
    row_keep: (B*Ns,) f32 per-row group keep.  Returns (sum, count) over the
    kept off-diagonal entries of 1 - X_g X_g^T across all groups."""
    R_total, D = x_flat.shape
    unit = Ns * 8 // math.gcd(Ns, 8)               # group- and sublane-aligned
    mxu_m = hw["mxu_m"]
    target = (mxu_m // unit) * unit if mxu_m >= unit else unit
    target = max(target, unit)
    if hw["cores"] > 1 and R_total > unit:
        target = min(target, _round_up(_ceil_div(R_total, hw["cores"]), unit))
    R_step = min(target, _round_up(R_total, unit))
    T = _ceil_div(R_total, R_step)
    R_pad = T * R_step

    if R_pad != R_total:
        x_pad = jnp.zeros((R_pad, D), jnp.bfloat16).at[:R_total].set(x_flat)
        keep_pad = jnp.zeros((R_pad, 1), jnp.float32).at[:R_total, 0].set(row_keep)
    else:
        x_pad = x_flat
        keep_pad = row_keep.reshape(R_pad, 1).astype(jnp.float32)

    # Tiny resident structural mask (identical for every step): same-group and
    # off-diagonal.  Replaces the reference's (Na, Ne, Ns, Ns) mask tensor.
    r = np.arange(R_step)
    struct_np = ((r[:, None] // Ns) == (r[None, :] // Ns)) & (r[:, None] != r[None, :])
    struct = jnp.asarray(struct_np.astype(np.float32))

    grid_spec = pltpu.PrefetchScalarGridSpec(
        num_scalar_prefetch=0,
        grid=(T,),
        in_specs=[
            pl.BlockSpec((R_step, D), lambda t: (t, 0)),
            pl.BlockSpec((R_step, 1), lambda t: (t, 0)),
            pl.BlockSpec((R_step, R_step), lambda t: (0, 0)),
        ],
        out_specs=pl.BlockSpec((None, 1, 128), lambda t: (t, 0, 0)),
    )
    out = pl.pallas_call(
        _gram_kernel,
        out_shape=jax.ShapeDtypeStruct((T, 1, 128), jnp.float32),
        grid_spec=grid_spec,
        compiler_params=pltpu.CompilerParams(
            dimension_semantics=("parallel",),
            vmem_limit_bytes=hw["vmem_limit"]),
    )(x_pad, keep_pad, struct)
    return out[:, 0, 0].sum(), out[:, 0, 1].sum()


# --------------------------------------------------------------------------
# Unused-in-forward module parameters (shape fidelity with __init__)
# --------------------------------------------------------------------------
def position_encoding_init(n_position, d_hid):
    pos = np.arange(n_position)[:, None].astype(np.float64)
    i = np.arange(d_hid)[None, :]
    angle = pos / np.power(10000.0, 2.0 * (i // 2) / d_hid)
    enc = np.zeros((n_position, d_hid), dtype=np.float32)
    enc[:, 0::2] = np.sin(angle[:, 0::2])
    enc[:, 1::2] = np.cos(angle[:, 1::2])
    return enc


# --------------------------------------------------------------------------
# DVSA forward
# --------------------------------------------------------------------------
def dvsa_forward(vis_feats, word_feats, entities_length, *,
                 Na, Nb, Ne, delta, vis_lam, phase="train"):
    M, D = vis_feats.shape
    Ns = M // (Na * Nb)
    N = Na * Ne
    hw = _hw_config()

    ents = np.asarray(entities_length, dtype=np.int64)
    # zero2one
    div_vec = jnp.asarray(np.where(ents == 0, 1, ents).astype(np.float32))  # (Na,)

    # column keep mask (S_mask is row-independent): keep[a*Ne+e] = e < ents[a]
    col_keep_np = np.ones((Na, Ne), dtype=np.float32)
    for a, l in enumerate(ents):
        col_keep_np[a, int(l):] = 0.0
    col_keep = jnp.asarray(col_keep_np.reshape(N))

    # ---- Pallas kernel 1: masked similarity, fused max/argmax over Nb ------
    S_max, D_ind = masked_similarity(vis_feats, word_feats, col_keep,
                                     Na, Ns, Nb, hw)
    D_sim = S_max                                   # (Na*Ns, Na*Ne)

    vis_loss = jnp.float32(0.0)
    if phase == "train":
        # The train path only needs the diagonal-action slices of S_max/D_ind
        # (sim_scr[a,s,e] == S_max[a*Ns+s, a*Ne+e], maxind likewise); the full
        # S_ tensor of the reference is never materialised.
        ar = jnp.arange(Na)
        sim_scr = S_max.reshape(Na, Ns, Na, Ne)[ar, :, ar, :]   # (Na, Ns, Ne)
        maxind = D_ind.reshape(Na, Ns, Na, Ne)[ar, :, ar, :]    # (Na, Ns, Ne)

        # TODO(synk): the reference indexes vis_feats with the raw per-group
        # argmax (0..Nb-1) without adding the (a*Ns+s)*Nb group offset;
        # reproduced verbatim even though it is likely a bug in the original.
        indarr = maxind.reshape(-1)
        vis_feats_cls = vis_feats[indarr].reshape(Na, Ns, Ne, D)
        vis_feats_cls = vis_feats_cls / (
            jnp.linalg.norm(vis_feats_cls, axis=3, keepdims=True) + EPS)

        smin = sim_scr.min(axis=1, keepdims=True)
        smax = sim_scr.max(axis=1, keepdims=True)
        sim_scr = (sim_scr - smin) / (smax - smin + EPS)
        vis_feats_cls = vis_feats_cls * sim_scr[..., None]

        # rows grouped per (action, entity): (Na*Ne*Ns, D)
        cls_rows = jnp.transpose(vis_feats_cls, (0, 2, 1, 3)).reshape(Na * Ne * Ns, D)
        row_keep = jnp.repeat(col_keep, Ns)         # keep[a*Ne+e] expanded per row
        # ---- Pallas kernel 2: off-diagonal stats of 1 - X @ X.T ------------
        vis_sum, vis_cnt = masked_gram_stats(cls_rows.astype(jnp.bfloat16),
                                             row_keep, Ns, hw)
        # max(cnt, 1) guards the all-masked case (original divides by zero).
        vis_loss = vis_sum / jnp.maximum(vis_cnt, 1.0)

    # ---- frame-level scores -------------------------------------------------
    S = S_max.reshape(Na, Ns, N)
    smin = S.min(axis=1, keepdims=True)
    smax = S.max(axis=1, keepdims=True)
    S_att = (S - smin) / (smax - smin + EPS)
    S = S * S_att
    Sf = S.reshape(Na, Ns, Na, Ne).sum(-1) / div_vec             # (Na, Ns, Na)
    Sf_diag = Sf[jnp.arange(Na), :, jnp.arange(Na)][:, :, None]  # (Na, Ns, 1)

    frame_score = (
        jax.nn.relu(Sf - jnp.transpose(Sf_diag, (2, 1, 0)) + delta).mean(axis=0).T
        + jax.nn.relu(Sf - Sf_diag + delta).mean(axis=2)
    )
    if phase == "train":
        margin_loss = (frame_score.mean() + vis_lam * vis_loss) * 10.0
    else:
        margin_loss = frame_score.mean() * 10.0

    return D_ind, D_sim, margin_loss


# --------------------------------------------------------------------------
if __name__ == "__main__":
    # args / cfg (small synthetic configuration)
    Na = 2            # batch_size
    Nb = 8            # cfg.TEST.RPN_POST_NMS_TOP_N
    Ns = 4            # segments per video (implied by vis_feats rows)
    Ne = 4            # max_ent_len
    D = 128           # word_ebd_dim
    n_head, d_k, d_v = 2, 16, 16
    n_position, sample_num = 32, 8
    delta, vis_lam = 0.5, 1.0
    entities_length = [3, 0]

    key = jax.random.PRNGKey(0)
    kv, kw, kf = jax.random.split(key, 3)
    vis_feats = jax.random.normal(kv, (Na * Ns * Nb, D), dtype=jnp.float32)
    word_feats = jax.random.normal(kw, (Na * Ne, D), dtype=jnp.float32)

    # __init__ parameters -- deterministic, but never used by forward().
    position_enc_w = jnp.asarray(position_encoding_init(n_position, D))
    ffn_w = jax.random.normal(kf, (sample_num, 2 * D), dtype=jnp.float32) * 0.02
    ffn_b = jnp.zeros((sample_num,), dtype=jnp.float32)
    # TODO(synk): self.slf_attn (MultiHeadAttention) and the params above are
    # constructed in __init__ but never invoked in forward(); no compute to port.

    D_ind, D_sim, margin_loss = dvsa_forward(
        vis_feats, word_feats, entities_length,
        Na=Na, Nb=Nb, Ne=Ne, delta=delta, vis_lam=vis_lam, phase="train")

    jax.block_until_ready((D_ind, D_sim, margin_loss))
    assert D_ind.shape == (Na * Ns, Na * Ne)
    assert D_sim.shape == (Na * Ns, Na * Ne)
    assert margin_loss.shape == ()
    print("KERNEL_OK")
</pallas_src>

<mosaic_0001>
module attributes {stable_mosaic.version = 11 : i64} {
  func.func @_sim_kernel(%arg0: i32, %arg1: memref<8x8x128xbf16, #tpu.memory_space<vmem>>, %arg2: memref<128x128xbf16, #tpu.memory_space<vmem>>, %arg3: memref<1x8x128xf32, #tpu.memory_space<vmem>>, %arg4: memref<1x8x128xi32, #tpu.memory_space<vmem>>) attributes {dimension_semantics = [#tpu.dimension_semantics<parallel>], iteration_bounds = array<i64: 1>, scalar_prefetch = 0 : i64, scratch_operands = 0 : i64, tpu.core_type = #tpu.core_type<tc>, window_params = [{transform_indices = @transform_0, window_bounds = array<i64: 8, 8, 128>}, {pipeline_mode = #tpu.pipeline_mode<synchronous>, transform_indices = @transform_1, window_bounds = array<i64: 128, 128>}, {transform_indices = @transform_2, window_bounds = array<i64: 1, 8, 128>}, {transform_indices = @transform_3, window_bounds = array<i64: 1, 8, 128>}]} {
    %c0 = arith.constant 0 : index
    %c0_0 = arith.constant 0 : index
    %c0_1 = arith.constant 0 : index
    %0 = vector.load %arg1[%c0, %c0_0, %c0_1] : memref<8x8x128xbf16, #tpu.memory_space<vmem>>, vector<8x8x128xbf16>
    %1 = vector.shape_cast %0 : vector<8x8x128xbf16> to vector<64x128xbf16>
    %c0_2 = arith.constant 0 : index
    %c0_3 = arith.constant 0 : index
    %2 = vector.load %arg2[%c0_2, %c0_3] : memref<128x128xbf16, #tpu.memory_space<vmem>>, vector<128x128xbf16>
    %cst = arith.constant dense<0.000000e+00> : vector<64x128xf32>
    %3 = tpu.matmul %1, %2, %cst {dimension_numbers = #tpu.dot_dimension_numbers<[1], [1], [0], [0], [0, 0, 1, 0], [], []>} : vector<64x128xbf16>, vector<128x128xbf16>, vector<64x128xf32> -> vector<64x128xf32>
    %4 = vector.shape_cast %3 : vector<64x128xf32> to vector<8x8x128xf32>
    %5 = vector.extract_strided_slice %4 {offsets = [0, 0, 0], sizes = [8, 1, 128], strides = [1, 1, 1]} : vector<8x8x128xf32> to vector<8x1x128xf32>
    %6 = vector.shape_cast %5 : vector<8x1x128xf32> to vector<8x128xf32>
    %c0_i32 = arith.constant 0 : i32
    %7 = vector.broadcast %c0_i32 : i32 to vector<8x128xi32>
    %8 = vector.extract_strided_slice %4 {offsets = [0, 1, 0], sizes = [8, 1, 128], strides = [1, 1, 1]} : vector<8x8x128xf32> to vector<8x1x128xf32>
    %9 = vector.shape_cast %8 : vector<8x1x128xf32> to vector<8x128xf32>
    %10 = arith.cmpf ogt, %9, %6 : vector<8x128xf32>
    %11 = arith.select %10, %9, %6 : vector<8x128xi1>, vector<8x128xf32>
    %c1_i32 = arith.constant 1 : i32
    %12 = vector.broadcast %c1_i32 : i32 to vector<8x128xi32>
    %13 = arith.select %10, %12, %7 : vector<8x128xi1>, vector<8x128xi32>
    %14 = vector.extract_strided_slice %4 {offsets = [0, 2, 0], sizes = [8, 1, 128], strides = [1, 1, 1]} : vector<8x8x128xf32> to vector<8x1x128xf32>
    %15 = vector.shape_cast %14 : vector<8x1x128xf32> to vector<8x128xf32>
    %16 = arith.cmpf ogt, %15, %11 : vector<8x128xf32>
    %17 = arith.select %16, %15, %11 : vector<8x128xi1>, vector<8x128xf32>
    %c2_i32 = arith.constant 2 : i32
    %18 = vector.broadcast %c2_i32 : i32 to vector<8x128xi32>
    %19 = arith.select %16, %18, %13 : vector<8x128xi1>, vector<8x128xi32>
    %20 = vector.extract_strided_slice %4 {offsets = [0, 3, 0], sizes = [8, 1, 128], strides = [1, 1, 1]} : vector<8x8x128xf32> to vector<8x1x128xf32>
    %21 = vector.shape_cast %20 : vector<8x1x128xf32> to vector<8x128xf32>
    %22 = arith.cmpf ogt, %21, %17 : vector<8x128xf32>
    %23 = arith.select %22, %21, %17 : vector<8x128xi1>, vector<8x128xf32>
    %c3_i32 = arith.constant 3 : i32
    %24 = vector.broadcast %c3_i32 : i32 to vector<8x128xi32>
    %25 = arith.select %22, %24, %19 : vector<8x128xi1>, vector<8x128xi32>
    %26 = vector.extract_strided_slice %4 {offsets = [0, 4, 0], sizes = [8, 1, 128], strides = [1, 1, 1]} : vector<8x8x128xf32> to vector<8x1x128xf32>
    %27 = vector.shape_cast %26 : vector<8x1x128xf32> to vector<8x128xf32>
    %28 = arith.cmpf ogt, %27, %23 : vector<8x128xf32>
    %29 = arith.select %28, %27, %23 : vector<8x128xi1>, vector<8x128xf32>
    %c4_i32 = arith.constant 4 : i32
    %30 = vector.broadcast %c4_i32 : i32 to vector<8x128xi32>
    %31 = arith.select %28, %30, %25 : vector<8x128xi1>, vector<8x128xi32>
    %32 = vector.extract_strided_slice %4 {offsets = [0, 5, 0], sizes = [8, 1, 128], strides = [1, 1, 1]} : vector<8x8x128xf32> to vector<8x1x128xf32>
    %33 = vector.shape_cast %32 : vector<8x1x128xf32> to vector<8x128xf32>
    %34 = arith.cmpf ogt, %33, %29 : vector<8x128xf32>
    %35 = arith.select %34, %33, %29 : vector<8x128xi1>, vector<8x128xf32>
    %c5_i32 = arith.constant 5 : i32
    %36 = vector.broadcast %c5_i32 : i32 to vector<8x128xi32>
    %37 = arith.select %34, %36, %31 : vector<8x128xi1>, vector<8x128xi32>
    %38 = vector.extract_strided_slice %4 {offsets = [0, 6, 0], sizes = [8, 1, 128], strides = [1, 1, 1]} : vector<8x8x128xf32> to vector<8x1x128xf32>
    %39 = vector.shape_cast %38 : vector<8x1x128xf32> to vector<8x128xf32>
    %40 = arith.cmpf ogt, %39, %35 : vector<8x128xf32>
    %41 = arith.select %40, %39, %35 : vector<8x128xi1>, vector<8x128xf32>
    %c6_i32 = arith.constant 6 : i32
    %42 = vector.broadcast %c6_i32 : i32 to vector<8x128xi32>
    %43 = arith.select %40, %42, %37 : vector<8x128xi1>, vector<8x128xi32>
    %44 = vector.extract_strided_slice %4 {offsets = [0, 7, 0], sizes = [8, 1, 128], strides = [1, 1, 1]} : vector<8x8x128xf32> to vector<8x1x128xf32>
    %45 = vector.shape_cast %44 : vector<8x1x128xf32> to vector<8x128xf32>
    %46 = arith.cmpf ogt, %45, %41 : vector<8x128xf32>
    %47 = arith.select %46, %45, %41 : vector<8x128xi1>, vector<8x128xf32>
    %c7_i32 = arith.constant 7 : i32
    %48 = vector.broadcast %c7_i32 : i32 to vector<8x128xi32>
    %49 = arith.select %46, %48, %43 : vector<8x128xi1>, vector<8x128xi32>
    %c0_4 = arith.constant 0 : index
    %c0_5 = arith.constant 0 : index
    %c0_6 = arith.constant 0 : index
    %50 = vector.load %arg3[%c0_4, %c0_5, %c0_6] : memref<1x8x128xf32, #tpu.memory_space<vmem>>, vector<1x8x128xf32>
    %51 = vector.shape_cast %50 : vector<1x8x128xf32> to vector<8x128xf32>
    %52 = vector.shape_cast %47 : vector<8x128xf32> to vector<1x8x128xf32>
    tpu.vector_store %arg3[%c0_4, %c0_5, %c0_6], %52 {strides = array<i32>} : memref<1x8x128xf32, #tpu.memory_space<vmem>>, vector<1x8x128xf32>,
    %c0_7 = arith.constant 0 : index
    %c0_8 = arith.constant 0 : index
    %c0_9 = arith.constant 0 : index
    %53 = vector.load %arg4[%c0_7, %c0_8, %c0_9] : memref<1x8x128xi32, #tpu.memory_space<vmem>>, vector<1x8x128xi32>
    %54 = vector.shape_cast %53 : vector<1x8x128xi32> to vector<8x128xi32>
    %55 = vector.shape_cast %49 : vector<8x128xi32> to vector<1x8x128xi32>
    tpu.vector_store %arg4[%c0_7, %c0_8, %c0_9], %55 {strides = array<i32>} : memref<1x8x128xi32, #tpu.memory_space<vmem>>, vector<1x8x128xi32>,
    return
  }
  func.func @transform_0(%arg0: i32) -> (i32, i32, i32) {
    %c0_i32 = arith.constant 0 : i32
    %c0_i32_0 = arith.constant 0 : i32
    %c0_i32_1 = arith.constant 0 : i32
    return %arg0, %c0_i32, %c0_i32_0 : i32, i32, i32
  }
  func.func @transform_1(%arg0: i32) -> (i32, i32) {
    %c0_i32 = arith.constant 0 : i32
    %c0_i32_0 = arith.constant 0 : i32
    %c0_i32_1 = arith.constant 0 : i32
    return %c0_i32, %c0_i32_0 : i32, i32
  }
  func.func @transform_2(%arg0: i32) -> (i32, i32, i32) {
    %c0_i32 = arith.constant 0 : i32
    %c0_i32_0 = arith.constant 0 : i32
    %c0_i32_1 = arith.constant 0 : i32
    return %arg0, %c0_i32, %c0_i32_0 : i32, i32, i32
  }
  func.func @transform_3(%arg0: i32) -> (i32, i32, i32) {
    %c0_i32 = arith.constant 0 : i32
    %c0_i32_0 = arith.constant 0 : i32
    %c0_i32_1 = arith.constant 0 : i32
    return %arg0, %c0_i32, %c0_i32_0 : i32, i32, i32
  }
}

</mosaic_0001>

<llo_original>
// kernel: tpu_custom_call.1
$region0: #{tpu_custom_call.1}
  #allocation0 [shape = 'u32[]', space=smem, size = 0x4, offset = 0x4, fixed_abs, tag = 'smem constant byte address 0x4 - core index']
  #allocation1 [shape = 'u32[144,128]{1,0:T(1,128)}', space=vmem, size = 0x12000, scoped, tag = 'internal scratch']
  %s0 = inlined_call_operand.hbm [shape: bf16[8,8,128], index: 0, kind: input, shape index: {}]
  %s1 = inlined_call_operand.hbm [shape: bf16[128,128], index: 1, kind: input, shape index: {}]
  %s2 = inlined_call_operand.hbm [shape: f32[1,8,128], index: 2, kind: output, shape index: {0}]
  %s3 = inlined_call_operand.hbm [shape: s32[1,8,128], index: 3, kind: output, shape index: {1}]
  %4 = xla_tuple %s2, %s3
  %s5 = sld [smem:[#allocation0]]
  $region34: #{tpu_custom_call.1} parent=0
    _
  %s7 = ssub.s32 1, %s5
  %s8 = scalar_select 0, %s7, %s5
  $region1: #{tpu_custom_call.1} parent=0
    #allocation2 [shape = 'u8[16384]{0}', space=vmem, size = 0x4000, scoped, tag = 'input window, operand 0, single buffered']
    #allocation3 [shape = 's32[1]{0}', space=sflag, size = 0x4, scoped, tag = 'scoped memory for tpu_custom_call.1']
    #allocation4 [shape = 's32[1]{0}', space=sflag, size = 0x4, scoped, tag = 'scoped memory for tpu_custom_call.1']
    #allocation5 [shape = 'u8[32768]{0}', space=vmem, size = 0x8000, scoped, tag = 'input window, operand 1, single buffered']
    #allocation6 [shape = 's32[1]{0}', space=sflag, size = 0x4, scoped, tag = 'scoped memory for tpu_custom_call.1']
    #allocation7 [shape = 'u8[4096]{0}', space=vmem, size = 0x1000, scoped, tag = 'output window, operand 0, single buffered']
    #allocation8 [shape = 'u8[4096]{0}', space=vmem, size = 0x1000, scoped, tag = 'output window, operand 1, single buffered']
    #allocation9 [shape = 's32[1]{0}', space=sflag, size = 0x4, scoped, tag = 'scoped memory for tpu_custom_call.1']
    %9 = vsyncpa [#allocation3], 0
    %10 = vsyncpa [#allocation6], 0
    %11 = vsyncpa [#allocation4], 0
    %12 = vsyncpa [#allocation9], 0
    // Predicated region
    $region2: #{tpu_custom_call.1} parent=1 // pred_check
      _
    $region3: #{tpu_custom_call.1} parent=1 // pred_check_branch
      %14 = sbr.rel (0) target = $region5
    $region4: #{tpu_custom_call.1} parent=1 // pred_region
      %s16 = ssub.s32 512, 512
      %17 = vsyncadd [#allocation3], %s16
      %s18 = sshll.u32 [#allocation2], 4
      %s19 = int_to_ptr.vmem [resolvable:$true] %s18
      %24 = dma.hbm_to_vmem [thread:$0]  %s0, 512, %s19, [#allocation3], 64, 64, 4
    $region5: #{tpu_custom_call.1} parent=1 // pred_fallthru
      _
    // Predicated region
    $region6: #{tpu_custom_call.1} parent=1 // pred_check
      _
    $region7: #{tpu_custom_call.1} parent=1 // pred_check_branch
      %26 = sbr.rel (0) target = $region9
    $region8: #{tpu_custom_call.1} parent=1 // pred_region
      %s28 = ssub.s32 1024, 1024
      %29 = vsyncadd [#allocation6], %s28
      %s30 = sshll.u32 [#allocation5], 4
      %s31 = int_to_ptr.vmem [resolvable:$true] %s30
      %36 = dma.hbm_to_vmem [thread:$0]  %s1, 1024, %s31, [#allocation6], 64, 64, 4
    $region9: #{tpu_custom_call.1} parent=1 // pred_fallthru
      _
    // Predicated region
    $region10: #{tpu_custom_call.1} parent=1 // pred_check
      _
    $region11: #{tpu_custom_call.1} parent=1 // pred_check_branch
      %38 = sbr.rel (0) target = $region13
    $region12: #{tpu_custom_call.1} parent=1 // pred_region
      %39 = dma.done [#allocation3], 512
    $region13: #{tpu_custom_call.1} parent=1 // pred_fallthru
      _
    // Predicated region
    $region14: #{tpu_custom_call.1} parent=1 // pred_check
      _
    $region15: #{tpu_custom_call.1} parent=1 // pred_check_branch
      %41 = sbr.rel (0) target = $region17
    $region16: #{tpu_custom_call.1} parent=1 // pred_region
      %42 = dma.done [#allocation6], 1024
    $region17: #{tpu_custom_call.1} parent=1 // pred_fallthru
      _
    %v44 = vld [vmem:[#allocation2] sm:$0xf]
    %v45 = vld [vmem:[#allocation2 + $0x4] sm:$0xf]
    %v46 = vld [vmem:[#allocation2 + $0x8] sm:$0xf]
    %v47 = vld [vmem:[#allocation2 + $0xc] sm:$0xf]
    %v48 = vld [vmem:[#allocation2 + $0x10] sm:$0xf]
    %v49 = vld [vmem:[#allocation2 + $0x14] sm:$0xf]
    %v50 = vld [vmem:[#allocation2 + $0x18] sm:$0xf]
    %v51 = vld [vmem:[#allocation2 + $0x1c] sm:$0xf]
    %v52 = vld [vmem:[#allocation5] sm:$0xf]
    %v53 = vld [vmem:[#allocation5 + $0x4] sm:$0xf]
    %v54 = vld [vmem:[#allocation5 + $0x8] sm:$0xf]
    %v55 = vld [vmem:[#allocation5 + $0xc] sm:$0xf]
    %v56 = vld [vmem:[#allocation5 + $0x10] sm:$0xf]
    %v57 = vld [vmem:[#allocation5 + $0x14] sm:$0xf]
    %v58 = vld [vmem:[#allocation5 + $0x18] sm:$0xf]
    %v59 = vld [vmem:[#allocation5 + $0x1c] sm:$0xf]
    %v60 = vld [vmem:[#allocation5 + $0x20] sm:$0xf]
    %v61 = vld [vmem:[#allocation5 + $0x24] sm:$0xf]
    %v62 = vld [vmem:[#allocation5 + $0x28] sm:$0xf]
    %v63 = vld [vmem:[#allocation5 + $0x2c] sm:$0xf]
    %v64 = vld [vmem:[#allocation5 + $0x30] sm:$0xf]
    %v65 = vld [vmem:[#allocation5 + $0x34] sm:$0xf]
    %v66 = vld [vmem:[#allocation5 + $0x38] sm:$0xf]
    %v67 = vld [vmem:[#allocation5 + $0x3c] sm:$0xf]
    %v76 = vunpack.c.l.b16 %v44
    %v77 = vunpack.c.l.b16 %v45
    %v78 = vunpack.c.l.b16 %v46
    %v79 = vunpack.c.l.b16 %v47
    %v80 = vunpack.c.l.b16 %v48
    %v81 = vunpack.c.l.b16 %v49
    %v82 = vunpack.c.l.b16 %v50
    %v83 = vunpack.c.l.b16 %v51
    %v84 = vpack.c.b16 %v77, %v76
    %v85 = vpack.c.b16 %v79, %v78
    %v86 = vpack.c.b16 %v81, %v80
    %v87 = vpack.c.b16 %v83, %v82
    %v108 = vunpack.c.l.b16 %v52
    %v109 = vunpack.c.l.b16 %v53
    %v110 = vunpack.c.l.b16 %v54
    %v111 = vunpack.c.l.b16 %v55
    %v112 = vunpack.c.l.b16 %v56
    %v113 = vunpack.c.l.b16 %v57
    %v114 = vunpack.c.l.b16 %v58
    %v115 = vunpack.c.l.b16 %v59
    %v116 = vunpack.c.l.b16 %v60
    %v117 = vunpack.c.l.b16 %v61
    %v118 = vunpack.c.l.b16 %v62
    %v119 = vunpack.c.l.b16 %v63
    %v120 = vunpack.c.l.b16 %v64
    %v121 = vunpack.c.l.b16 %v65
    %v122 = vunpack.c.l.b16 %v66
    %v123 = vunpack.c.l.b16 %v67
    %v124 = vpack.c.b16 %v109, %v108
    %v125 = vpack.c.b16 %v111, %v110
    %v126 = vpack.c.b16 %v113, %v112
    %v127 = vpack.c.b16 %v115, %v114
    %v128 = vpack.c.b16 %v117, %v116
    %v129 = vpack.c.b16 %v119, %v118
    %v130 = vpack.c.b16 %v121, %v120
    %v131 = vpack.c.b16 %v123, %v122
    %140 = vmatprep.subr.bf16.mxu0 0
    %141 = vmatpush1.bf16.xpose.msra.mxu0 %v124
    %142 = vmatprep.subr.bf16.mxu0 0
    %143 = vmatpush1.bf16.xpose.msra.mxu0 %v125
    %144 = vmatprep.subr.bf16.mxu0 0
    %145 = vmatpush1.bf16.xpose.msra.mxu0 %v126
    %146 = vmatprep.subr.bf16.mxu0 0
    %147 = vmatpush1.bf16.xpose.msra.mxu0 %v127
    %148 = vmatprep.subr.bf16.mxu0 0
    %149 = vmatpush1.bf16.xpose.msra.mxu0 %v128
    %150 = vmatprep.subr.bf16.mxu0 0
    %151 = vmatpush1.bf16.xpose.msra.mxu0 %v129
    %152 = vmatprep.subr.bf16.mxu0 0
    %153 = vmatpush1.bf16.xpose.msra.mxu0 %v130
    %154 = vmatprep.subr.bf16.mxu0 0
    %155 = vmatpush1.bf16.xpose.msra.mxu0 %v131
    %156 = vmatprep.subr.bf16.mxu0 0
    %157 = vmatpush1.bf16.xpose.msra.mxu0 0
    %158 = vmatprep.subr.bf16.mxu0 0
    %159 = vmatpush1.bf16.xpose.msra.mxu0 0
    %160 = vmatprep.subr.bf16.mxu0 0
    %161 = vmatpush1.bf16.xpose.msra.mxu0 0
    %162 = vmatprep.subr.bf16.mxu0 0
    %163 = vmatpush1.bf16.xpose.msra.mxu0 0
    %164 = vmatprep.subr.bf16.mxu0 0
    %165 = vmatpush1.bf16.xpose.msra.mxu0 0
    %166 = vmatprep.subr.bf16.mxu0 0
    %167 = vmatpush1.bf16.xpose.msra.mxu0 0
    %168 = vmatprep.subr.bf16.mxu0 0
    %169 = vmatpush1.bf16.xpose.msra.mxu0 0
    %170 = vmatprep.subr.bf16.mxu0 0
    %171 = vmatpush1.bf16.xpose.msra.mxu0 0
    %172 = vmatprep.mubr.bf16.mxu0 0
    %173 = vmatmul.mubr.bf16.gmra.mrb[0].mxu0 %v84
    %v174 = vpop.f32.mrb[0].mxu0
    %v175 = vadd.f32 0.0, %v174
    %v176 = vpop.f32.mrb[0].mxu0
    %v177 = vpop.f32.mrb[0].mxu0
    %v178 = vadd.f32 0.0, %v177
    %v179 = vpop.f32.mrb[0].mxu0
    %180 = vmatprep.mubr.bf16.mxu0 0
    %181 = vmatmul.mubr.bf16.gmra.mrb[0].mxu0 %v85
    %v182 = vpop.f32.mrb[0].mxu0
    %v183 = vadd.f32 0.0, %v182
    %v184 = vpop.f32.mrb[0].mxu0
    %v185 = vpop.f32.mrb[0].mxu0
    %v186 = vadd.f32 0.0, %v185
    %v187 = vpop.f32.mrb[0].mxu0
    %188 = vmatprep.mubr.bf16.mxu0 0
    %189 = vmatmul.mubr.bf16.gmra.mrb[0].mxu0 %v86
    %v190 = vpop.f32.mrb[0].mxu0
    %v191 = vadd.f32 0.0, %v190
    %v192 = vpop.f32.mrb[0].mxu0
    %v193 = vpop.f32.mrb[0].mxu0
    %v194 = vadd.f32 0.0, %v193
    %v195 = vpop.f32.mrb[0].mxu0
    %196 = vmatprep.mubr.bf16.mxu0 0
    %197 = vmatmul.mubr.bf16.gmra.mrb[0].mxu0 %v87
    %v198 = vpop.f32.mrb[0].mxu0
    %v199 = vadd.f32 0.0, %v198
    %v200 = vpop.f32.mrb[0].mxu0
    %v201 = vpop.f32.mrb[0].mxu0
    %v202 = vadd.f32 0.0, %v201
    %v203 = vpop.f32.mrb[0].mxu0
    %204 = vdwg.mxu0
    %v213 = vrot.slane %v175, 7
    %v214 = vrot.slane %v178, 7
    %v215 = vrot.slane %v183, 7
    %v216 = vrot.slane %v186, 7
    %v217 = vrot.slane %v191, 7
    %v218 = vrot.slane %v194, 7
    %v219 = vrot.slane %v199, 7
    %v220 = vrot.slane %v202, 7
    %vm229 = vcmp.gt.f32.partialorder %v175, %v213
    %vm230 = vcmp.gt.f32.partialorder %v178, %v214
    %vm231 = vcmp.gt.f32.partialorder %v183, %v215
    %vm232 = vcmp.gt.f32.partialorder %v186, %v216
    %vm233 = vcmp.gt.f32.partialorder %v191, %v217
    %vm234 = vcmp.gt.f32.partialorder %v194, %v218
    %vm235 = vcmp.gt.f32.partialorder %v199, %v219
    %vm236 = vcmp.gt.f32.partialorder %v202, %v220
    %v237 = vsel %vm229, %v175, %v213
    %v238 = vsel %vm230, %v178, %v214
    %v239 = vsel %vm231, %v183, %v215
    %v240 = vsel %vm232, %v186, %v216
    %v241 = vsel %vm233, %v191, %v217
    %v242 = vsel %vm234, %v194, %v218
    %v243 = vsel %vm235, %v199, %v219
    %v244 = vsel %vm236, %v202, %v220
    %v245 = vsel %vm229, 1, 0
    %v246 = vsel %vm230, 1, 0
    %v247 = vsel %vm231, 1, 0
    %v248 = vsel %vm232, 1, 0
    %v249 = vsel %vm233, 1, 0
    %v250 = vsel %vm234, 1, 0
    %v251 = vsel %vm235, 1, 0
    %v252 = vsel %vm236, 1, 0
    %v261 = vrot.slane %v237, 7
    %v262 = vrot.slane %v238, 7
    %v263 = vrot.slane %v239, 7
    %v264 = vrot.slane %v240, 7
    %v265 = vrot.slane %v241, 7
    %v266 = vrot.slane %v242, 7
    %v267 = vrot.slane %v243, 7
    %v268 = vrot.slane %v244, 7
    %vm277 = vcmp.gt.f32.partialorder %v175, %v261
    %vm278 = vcmp.gt.f32.partialorder %v178, %v262
    %vm279 = vcmp.gt.f32.partialorder %v183, %v263
    %vm280 = vcmp.gt.f32.partialorder %v186, %v264
    %vm281 = vcmp.gt.f32.partialorder %v191, %v265
    %vm282 = vcmp.gt.f32.partialorder %v194, %v266
    %vm283 = vcmp.gt.f32.partialorder %v199, %v267
    %vm284 = vcmp.gt.f32.partialorder %v202, %v268
    %v285 = vsel %vm277, %v175, %v261
    %v286 = vsel %vm278, %v178, %v262
    %v287 = vsel %vm279, %v183, %v263
    %v288 = vsel %vm280, %v186, %v264
    %v289 = vsel %vm281, %v191, %v265
    %v290 = vsel %vm282, %v194, %v266
    %v291 = vsel %vm283, %v199, %v267
    %v292 = vsel %vm284, %v202, %v268
    %v293 = vrot.slane %v245, 7
    %v294 = vrot.slane %v246, 7
    %v295 = vrot.slane %v247, 7
    %v296 = vrot.slane %v248, 7
    %v297 = vrot.slane %v249, 7
    %v298 = vrot.slane %v250, 7
    %v299 = vrot.slane %v251, 7
    %v300 = vrot.slane %v252, 7
    %v301 = vsel %vm277, 2, %v293
    %v302 = vsel %vm278, 2, %v294
    %v303 = vsel %vm279, 2, %v295
    %v304 = vsel %vm280, 2, %v296
    %v305 = vsel %vm281, 2, %v297
    %v306 = vsel %vm282, 2, %v298
    %v307 = vsel %vm283, 2, %v299
    %v308 = vsel %vm284, 2, %v300
    %v317 = vrot.slane %v285, 7
    %v318 = vrot.slane %v286, 7
    %v319 = vrot.slane %v287, 7
    %v320 = vrot.slane %v288, 7
    %v321 = vrot.slane %v289, 7
    %v322 = vrot.slane %v290, 7
    %v323 = vrot.slane %v291, 7
    %v324 = vrot.slane %v292, 7
    %vm333 = vcmp.gt.f32.partialorder %v175, %v317
    %vm334 = vcmp.gt.f32.partialorder %v178, %v318
    %vm335 = vcmp.gt.f32.partialorder %v183, %v319
    %vm336 = vcmp.gt.f32.partialorder %v186, %v320
    %vm337 = vcmp.gt.f32.partialorder %v191, %v321
    %vm338 = vcmp.gt.f32.partialorder %v194, %v322
    %vm339 = vcmp.gt.f32.partialorder %v199, %v323
    %vm340 = vcmp.gt.f32.partialorder %v202, %v324
    %v341 = vsel %vm333, %v175, %v317
    %v342 = vsel %vm334, %v178, %v318
    %v343 = vsel %vm335, %v183, %v319
    %v344 = vsel %vm336, %v186, %v320
    %v345 = vsel %vm337, %v191, %v321
    %v346 = vsel %vm338, %v194, %v322
    %v347 = vsel %vm339, %v199, %v323
    %v348 = vsel %vm340, %v202, %v324
    %v349 = vrot.slane %v301, 7
    %v350 = vrot.slane %v302, 7
    %v351 = vrot.slane %v303, 7
    %v352 = vrot.slane %v304, 7
    %v353 = vrot.slane %v305, 7
    %v354 = vrot.slane %v306, 7
    %v355 = vrot.slane %v307, 7
    %v356 = vrot.slane %v308, 7
    %v357 = vsel %vm333, 3, %v349
    %v358 = vsel %vm334, 3, %v350
    %v359 = vsel %vm335, 3, %v351
    %v360 = vsel %vm336, 3, %v352
    %v361 = vsel %vm337, 3, %v353
    %v362 = vsel %vm338, 3, %v354
    %v363 = vsel %vm339, 3, %v355
    %v364 = vsel %vm340, 3, %v356
    %v373 = vrot.slane %v341, 7
    %v374 = vrot.slane %v342, 7
    %v375 = vrot.slane %v343, 7
    %v376 = vrot.slane %v344, 7
    %v377 = vrot.slane %v345, 7
    %v378 = vrot.slane %v346, 7
    %v379 = vrot.slane %v347, 7
    %v380 = vrot.slane %v348, 7
    %vm389 = vcmp.gt.f32.partialorder %v175, %v373
    %vm390 = vcmp.gt.f32.partialorder %v178, %v374
    %vm391 = vcmp.gt.f32.partialorder %v183, %v375
    %vm392 = vcmp.gt.f32.partialorder %v186, %v376
    %vm393 = vcmp.gt.f32.partialorder %v191, %v377
    %vm394 = vcmp.gt.f32.partialorder %v194, %v378
    %vm395 = vcmp.gt.f32.partialorder %v199, %v379
    %vm396 = vcmp.gt.f32.partialorder %v202, %v380
    %v397 = vsel %vm389, %v175, %v373
    %v398 = vsel %vm390, %v178, %v374
    %v399 = vsel %vm391, %v183, %v375
    %v400 = vsel %vm392, %v186, %v376
    %v401 = vsel %vm393, %v191, %v377
    %v402 = vsel %vm394, %v194, %v378
    %v403 = vsel %vm395, %v199, %v379
    %v404 = vsel %vm396, %v202, %v380
    %v405 = vrot.slane %v357, 7
    %v406 = vrot.slane %v358, 7
    %v407 = vrot.slane %v359, 7
    %v408 = vrot.slane %v360, 7
    %v409 = vrot.slane %v361, 7
    %v410 = vrot.slane %v362, 7
    %v411 = vrot.slane %v363, 7
    %v412 = vrot.slane %v364, 7
    %v413 = vsel %vm389, 4, %v405
    %v414 = vsel %vm390, 4, %v406
    %v415 = vsel %vm391, 4, %v407
    %v416 = vsel %vm392, 4, %v408
    %v417 = vsel %vm393, 4, %v409
    %v418 = vsel %vm394, 4, %v410
    %v419 = vsel %vm395, 4, %v411
    %v420 = vsel %vm396, 4, %v412
    %v429 = vrot.slane %v397, 7
    %v430 = vrot.slane %v398, 7
    %v431 = vrot.slane %v399, 7
    %v432 = vrot.slane %v400, 7
    %v433 = vrot.slane %v401, 7
    %v434 = vrot.slane %v402, 7
    %v435 = vrot.slane %v403, 7
    %v436 = vrot.slane %v404, 7
    %vm445 = vcmp.gt.f32.partialorder %v175, %v429
    %vm446 = vcmp.gt.f32.partialorder %v178, %v430
    %vm447 = vcmp.gt.f32.partialorder %v183, %v431
    %vm448 = vcmp.gt.f32.partialorder %v186, %v432
    %vm449 = vcmp.gt.f32.partialorder %v191, %v433
    %vm450 = vcmp.gt.f32.partialorder %v194, %v434
    %vm451 = vcmp.gt.f32.partialorder %v199, %v435
    %vm452 = vcmp.gt.f32.partialorder %v202, %v436
    %v453 = vsel %vm445, %v175, %v429
    %v454 = vsel %vm446, %v178, %v430
    %v455 = vsel %vm447, %v183, %v431
    %v456 = vsel %vm448, %v186, %v432
    %v457 = vsel %vm449, %v191, %v433
    %v458 = vsel %vm450, %v194, %v434
    %v459 = vsel %vm451, %v199, %v435
    %v460 = vsel %vm452, %v202, %v436
    %v461 = vrot.slane %v413, 7
    %v462 = vrot.slane %v414, 7
    %v463 = vrot.slane %v415, 7
    %v464 = vrot.slane %v416, 7
    %v465 = vrot.slane %v417, 7
    %v466 = vrot.slane %v418, 7
    %v467 = vrot.slane %v419, 7
    %v468 = vrot.slane %v420, 7
    %v469 = vsel %vm445, 5, %v461
    %v470 = vsel %vm446, 5, %v462
    %v471 = vsel %vm447, 5, %v463
    %v472 = vsel %vm448, 5, %v464
    %v473 = vsel %vm449, 5, %v465
    %v474 = vsel %vm450, 5, %v466
    %v475 = vsel %vm451, 5, %v467
    %v476 = vsel %vm452, 5, %v468
    %v485 = vrot.slane %v453, 7
    %v486 = vrot.slane %v454, 7
    %v487 = vrot.slane %v455, 7
    %v488 = vrot.slane %v456, 7
    %v489 = vrot.slane %v457, 7
    %v490 = vrot.slane %v458, 7
    %v491 = vrot.slane %v459, 7
    %v492 = vrot.slane %v460, 7
    %vm501 = vcmp.gt.f32.partialorder %v175, %v485
    %vm502 = vcmp.gt.f32.partialorder %v178, %v486
    %vm503 = vcmp.gt.f32.partialorder %v183, %v487
    %vm504 = vcmp.gt.f32.partialorder %v186, %v488
    %vm505 = vcmp.gt.f32.partialorder %v191, %v489
    %vm506 = vcmp.gt.f32.partialorder %v194, %v490
    %vm507 = vcmp.gt.f32.partialorder %v199, %v491
    %vm508 = vcmp.gt.f32.partialorder %v202, %v492
    %v509 = vsel %vm501, %v175, %v485
    %v510 = vsel %vm502, %v178, %v486
    %v511 = vsel %vm503, %v183, %v487
    %v512 = vsel %vm504, %v186, %v488
    %v513 = vsel %vm505, %v191, %v489
    %v514 = vsel %vm506, %v194, %v490
    %v515 = vsel %vm507, %v199, %v491
    %v516 = vsel %vm508, %v202, %v492
    %v517 = vrot.slane %v469, 7
    %v518 = vrot.slane %v470, 7
    %v519 = vrot.slane %v471, 7
    %v520 = vrot.slane %v472, 7
    %v521 = vrot.slane %v473, 7
    %v522 = vrot.slane %v474, 7
    %v523 = vrot.slane %v475, 7
    %v524 = vrot.slane %v476, 7
    %v525 = vsel %vm501, 6, %v517
    %v526 = vsel %vm502, 6, %v518
    %v527 = vsel %vm503, 6, %v519
    %v528 = vsel %vm504, 6, %v520
    %v529 = vsel %vm505, 6, %v521
    %v530 = vsel %vm506, 6, %v522
    %v531 = vsel %vm507, 6, %v523
    %v532 = vsel %vm508, 6, %v524
    %v541 = vrot.slane %v509, 7
    %v542 = vrot.slane %v510, 7
    %v543 = vrot.slane %v511, 7
    %v544 = vrot.slane %v512, 7
    %v545 = vrot.slane %v513, 7
    %v546 = vrot.slane %v514, 7
    %v547 = vrot.slane %v515, 7
    %v548 = vrot.slane %v516, 7
    %vm557 = vcmp.gt.f32.partialorder %v175, %v541
    %vm558 = vcmp.gt.f32.partialorder %v178, %v542
    %vm559 = vcmp.gt.f32.partialorder %v183, %v543
    %vm560 = vcmp.gt.f32.partialorder %v186, %v544
    %vm561 = vcmp.gt.f32.partialorder %v191, %v545
    %vm562 = vcmp.gt.f32.partialorder %v194, %v546
    %vm563 = vcmp.gt.f32.partialorder %v199, %v547
    %vm564 = vcmp.gt.f32.partialorder %v202, %v548
    %v565 = vsel %vm557, %v175, %v541
    %v566 = vsel %vm558, %v178, %v542
    %v567 = vsel %vm559, %v183, %v543
    %v568 = vsel %vm560, %v186, %v544
    %v569 = vsel %vm561, %v191, %v545
    %v570 = vsel %vm562, %v194, %v546
    %v571 = vsel %vm563, %v199, %v547
    %v572 = vsel %vm564, %v202, %v548
    %v573 = vrot.slane %v525, 7
    %v574 = vrot.slane %v526, 7
    %v575 = vrot.slane %v527, 7
    %v576 = vrot.slane %v528, 7
    %v577 = vrot.slane %v529, 7
    %v578 = vrot.slane %v530, 7
    %v579 = vrot.slane %v531, 7
    %v580 = vrot.slane %v532, 7
    %v581 = vsel %vm557, 7, %v573
    %v582 = vsel %vm558, 7, %v574
    %v583 = vsel %vm559, 7, %v575
    %v584 = vsel %vm560, 7, %v576
    %v585 = vsel %vm561, 7, %v577
    %v586 = vsel %vm562, 7, %v578
    %v587 = vsel %vm563, 7, %v579
    %v588 = vsel %vm564, 7, %v580
    %v597 = vrot.slane %v566, 7
    %v598 = vrot.slane %v567, 6
    %vm599 = vcmask 1041409
    %v600 = vsel %vm599, %v598, %v597
    %v601 = vrot.slane %v568, 5
    %vm602 = vcmask 1042434
    %v603 = vsel %vm602, %v601, %v600
    %v604 = vrot.slane %v569, 4
    %vm605 = vcmask 1043459
    %v606 = vsel %vm605, %v604, %v603
    %v607 = vrot.slane %v570, 3
    %vm608 = vcmask 1044484
    %v609 = vsel %vm608, %v607, %v606
    %v610 = vrot.slane %v571, 2
    %vm611 = vcmask 1045509
    %v612 = vsel %vm611, %v610, %v609
    %v613 = vrot.slane %v572, 1
    %vm614 = vcmask 1046534
    %v615 = vsel %vm614, %v613, %v612
    %618 = vst [vmem:[#allocation7 - $0x7] sm:$0x80] %v565
    %619 = vst [vmem:[#allocation7 + $0x1] sm:$0x7f] %v615
    %v620 = vrot.slane %v582, 7
    %v621 = vrot.slane %v583, 6
    %v622 = vsel %vm599, %v621, %v620
    %v623 = vrot.slane %v584, 5
    %v624 = vsel %vm602, %v623, %v622
    %v625 = vrot.slane %v585, 4
    %v626 = vsel %vm605, %v625, %v624
    %v627 = vrot.slane %v586, 3
    %v628 = vsel %vm608, %v627, %v626
    %v629 = vrot.slane %v587, 2
    %v630 = vsel %vm611, %v629, %v628
    %v631 = vrot.slane %v588, 1
    %v632 = vsel %vm614, %v631, %v630
    %633 = vst [vmem:[#allocation8 - $0x7] sm:$0x80] %v581
    %634 = vst [vmem:[#allocation8 + $0x1] sm:$0x7f] %v632
    // Predicated region
    $region18: #{tpu_custom_call.1} parent=1 // pred_check
      _
    $region19: #{tpu_custom_call.1} parent=1 // pred_check_branch
      %636 = sbr.rel (0) target = $region21
    $region20: #{tpu_custom_call.1} parent=1 // pred_region
      %s638 = ssub.s32 128, 128
      %639 = vsyncadd [#allocation4], %s638
      %s641 = sshll.u32 [#allocation7], 4
      %s642 = int_to_ptr.vmem [resolvable:$true] %s641
      %644 = dma.vmem_to_hbm [thread:$0]  %s642, 128, %s2, [#allocation4]
    $region21: #{tpu_custom_call.1} parent=1 // pred_fallthru
      _
    // Predicated region
    $region22: #{tpu_custom_call.1} parent=1 // pred_check
      _
    $region23: #{tpu_custom_call.1} parent=1 // pred_check_branch
      %646 = sbr.rel (0) target = $region25
    $region24: #{tpu_custom_call.1} parent=1 // pred_region
      %s648 = ssub.s32 128, 128
      %649 = vsyncadd [#allocation9], %s648
      %s651 = sshll.u32 [#allocation8], 4
      %s652 = int_to_ptr.vmem [resolvable:$true] %s651
      %654 = dma.vmem_to_hbm [thread:$0]  %s652, 128, %s3, [#allocation9]
    $region25: #{tpu_custom_call.1} parent=1 // pred_fallthru
      _
    // Predicated region
    $region26: #{tpu_custom_call.1} parent=1 // pred_check
      _
    $region27: #{tpu_custom_call.1} parent=1 // pred_check_branch
      %656 = sbr.rel (0) target = $region29
    $region28: #{tpu_custom_call.1} parent=1 // pred_region
      %657 = dma.done [#allocation4], 128
    $region29: #{tpu_custom_call.1} parent=1 // pred_fallthru
      _
    // Predicated region
    $region30: #{tpu_custom_call.1} parent=1 // pred_check
      _
    $region31: #{tpu_custom_call.1} parent=1 // pred_check_branch
      %659 = sbr.rel (0) target = $region33
    $region32: #{tpu_custom_call.1} parent=1 // pred_region
      %660 = dma.done [#allocation9], 128
    $region33: #{tpu_custom_call.1} parent=1 // pred_fallthru
      _
    %661 = vsyncpa [#allocation3], 1
    %662 = vsyncpa [#allocation6], 1
    %663 = vsyncpa [#allocation4], 1
    %664 = vsyncpa [#allocation9], 1

</llo_original>
